<compile_context>
chip_gen: v5e
topology: v5e:2x2
jax: 0.10.0
libtpu: 0.0.40
codegen_flags: <defaults>
</compile_context>

<pallas_src>
import functools
import math

import jax
import jax.numpy as jnp
from jax.experimental import pallas as pl
from jax.experimental.pallas import tpu as pltpu

MIN_LOG_STD = math.log(1e-6)   # min_std = 1e-6
INIT_LOG_STD = math.log(1.0)   # init_std = 1.0

LANE = 128
SUBLANE = 8
BATCH_TILE = 512      # max rows per grid step (512-1024 per perf review)
MIN_PAR_TILE = 128    # min rows per step when splitting just for multi-core


def _round_up(n, m):
    return ((n + m - 1) // m) * m


def _num_tensorcores():
    """2 on v7x-class chips (megacore sharding pays off), else 1."""
    try:
        kind = jax.devices()[0].device_kind.lower()
        return 2 if "v7" in kind else 1
    except Exception:  # pragma: no cover - defensive
        return 1


def _batch_plan(B):
    """Return (num_grid_steps, rows_per_step). steps == 1 => gridless path."""
    ncores = _num_tensorcores()
    if B > BATCH_TILE:
        steps = -(-B // BATCH_TILE)
    elif ncores >= 2 and B >= ncores * MIN_PAR_TILE:
        steps = ncores                      # engage both TCs on v7x
    else:
        return 1, B
    tile = _round_up(-(-B // steps), SUBLANE)   # balanced, 8-row aligned
    steps = -(-B // tile)
    return steps, tile


# ----------------------------------------------------------------------------
# Kernel
# ----------------------------------------------------------------------------
def _cavia_mlp_kernel(x_ref, w1_ref, w2_ref, wmu_ref, bias_ref, mu_ref,
                      *, h1p, h2p, outp):
    """Fused 3-layer MLP.

    x_ref   : (TB, in_size)   activation tile, UNPADDED last dim
    w1_ref  : (in_size, H1p)  x-part of layer-1 weight (ctx folded into bias)
    w2_ref  : (H1p, H2p)
    wmu_ref : (H2p, OUTp)
    bias_ref: (3, bmax) f32   rows = b1_eff (ctx folded), b2, bmu (zero padded)
    mu_ref  : (TB, OUTp)
    """
    cdt = w1_ref.dtype                       # compute dtype (f32 or bf16)
    b = bias_ref[...]                        # (3, bmax) f32

    x = x_ref[...].astype(cdt)               # (TB, in_size)

    # layer 1 (ctx contribution lives in bias row 0)
    h = jnp.dot(x, w1_ref[...], preferred_element_type=jnp.float32)
    h = jnp.maximum(h + b[0:1, 0:h1p], 0.0)

    # layer 2
    h = jnp.dot(h.astype(cdt), w2_ref[...], preferred_element_type=jnp.float32)
    h = jnp.maximum(h + b[1:2, 0:h2p], 0.0)

    # mu head (lane-dense, unmasked store)
    mu = jnp.dot(h.astype(cdt), wmu_ref[...], preferred_element_type=jnp.float32)
    mu_ref[...] = (mu + b[2:3, 0:outp]).astype(mu_ref.dtype)


# ----------------------------------------------------------------------------
# One-time parameter packing (hoisted out of the per-call forward)
# ----------------------------------------------------------------------------
def pack_cavia_params(params, input_size, compute_dtype=jnp.float32):
    """Transpose / zero-pad weights once per set of params.

    Returns a dict of device arrays + static dims used by the forward pass.
    """
    f32 = jnp.float32
    w1, b1 = params["layer1.weight"], params["layer1.bias"]
    w2, b2 = params["layer2.weight"], params["layer2.bias"]
    wmu, bmu = params["mu.weight"], params["mu.bias"]
    sigma = params["sigma"]

    h1, k1 = w1.shape
    h2 = w2.shape[0]
    out_size = wmu.shape[0]
    ncp = k1 - input_size

    h1p = _round_up(h1, LANE)
    h2p = _round_up(h2, LANE)
    outp = _round_up(out_size, LANE)
    bmax = max(h1p, h2p, outp)

    # x-part of layer-1 weight, pre-transposed & lane padded: (in_size, H1p)
    w1x = jnp.pad(w1[:, :input_size].astype(f32).T, ((0, 0), (0, h1p - h1)))
    # ctx-part, kept f32 for the tiny per-call bias fold: (ncp, bmax)
    w1ctx = jnp.pad(w1[:, input_size:].astype(f32).T, ((0, 0), (0, bmax - h1)))

    w2p = jnp.pad(w2.astype(f32).T, ((0, h1p - h1), (0, h2p - h2)))
    wmup = jnp.pad(wmu.astype(f32).T, ((0, h2p - h2), (0, outp - out_size)))

    bias_base = jnp.stack([
        jnp.pad(b1.astype(f32), (0, bmax - h1)),
        jnp.pad(b2.astype(f32), (0, bmax - h2)),
        jnp.pad(bmu.astype(f32), (0, bmax - out_size)),
    ], axis=0)                                               # (3, bmax) f32

    # batch-independent: precompute scale = exp(clamp(sigma, min_log_std))
    scale = jnp.exp(jnp.maximum(sigma.astype(f32), MIN_LOG_STD))

    return {
        "w1x": w1x.astype(compute_dtype),
        "w2": w2p.astype(compute_dtype),
        "wmu": wmup.astype(compute_dtype),
        "w1ctx": w1ctx,                 # f32
        "bias_base": bias_base,         # f32
        "scale": scale,                 # f32
        "dims": (input_size, ncp, out_size, h1p, h2p, outp, bmax),
    }


# ----------------------------------------------------------------------------
# Forward
# ----------------------------------------------------------------------------
def cavia_mlp_policy_forward(x, context_params, packed):
    """Full CAVIA-MLP forward. Returns (mu, scale) of Normal(mu, scale)."""
    in_size, ncp, out_size, h1p, h2p, outp, bmax = packed["dims"]
    B = x.shape[0]
    assert x.shape[1] == in_size
    assert context_params.shape[0] == ncp

    f32 = jnp.float32
    cdt = packed["w1x"].dtype

    # Fold ctx into layer-1 bias (tiny, batch-independent matvec).
    bias = packed["bias_base"].at[0].add(
        context_params.astype(f32) @ packed["w1ctx"])

    xk = x.astype(cdt)                      # unpadded lanes -> ~8x less HBM read

    steps, tile = _batch_plan(B)
    bp = steps * tile
    if bp != B:
        xk = jnp.pad(xk, ((0, bp - B), (0, 0)))

    kernel = functools.partial(_cavia_mlp_kernel, h1p=h1p, h2p=h2p, outp=outp)
    out_shape = jax.ShapeDtypeStruct((bp, outp), f32)
    inputs = (xk, packed["w1x"], packed["w2"], packed["wmu"], bias)

    if steps > 1:
        # Batch-tiled, "parallel" grid: shards across both TCs on v7x megacore.
        # Weight / bias specs have constant index maps -> stay resident in VMEM.
        mu_pad = pl.pallas_call(
            kernel,
            out_shape=out_shape,
            grid=(steps,),
            in_specs=[
                pl.BlockSpec((tile, in_size), lambda b: (b, 0)),
                pl.BlockSpec((in_size, h1p), lambda b: (0, 0)),
                pl.BlockSpec((h1p, h2p), lambda b: (0, 0)),
                pl.BlockSpec((h2p, outp), lambda b: (0, 0)),
                pl.BlockSpec((3, bmax), lambda b: (0, 0)),
            ],
            out_specs=pl.BlockSpec((tile, outp), lambda b: (b, 0)),
            compiler_params=pltpu.CompilerParams(
                dimension_semantics=("parallel",)),
        )(*inputs)
    else:
        # Gridless single invocation: whole arrays resident in VMEM, no
        # pipeline machinery, minimal fixed overhead for small RL batches.
        vmem = pl.BlockSpec(memory_space=pltpu.MemorySpace.VMEM)
        mu_pad = pl.pallas_call(
            kernel,
            out_shape=out_shape,
            in_specs=[vmem] * len(inputs),
            out_specs=vmem,
        )(*inputs)

    mu = mu_pad[:B, :out_size]
    # TODO(synk): torch.distributions.Normal object itself has no Pallas
    # equivalent; we return its (loc, scale) parameters instead.
    return mu, packed["scale"]


# ----------------------------------------------------------------------------
# Reference / test scaffolding
# ----------------------------------------------------------------------------
def make_params(key, input_size, hidden_sizes, output_size, num_context_params):
    """Deterministic synthetic parameters with the shapes from __init__."""
    assert len(hidden_sizes) == 2, "this script fixes hidden_sizes=(H1, H2)"
    h1, h2 = hidden_sizes
    k1, k2, k3 = jax.random.split(key, 3)
    return {
        "layer1.weight": 0.1 * jax.random.normal(
            k1, (h1, input_size + num_context_params), jnp.float32),
        "layer1.bias": jnp.zeros((h1,), jnp.float32),
        "layer2.weight": 0.1 * jax.random.normal(k2, (h2, h1), jnp.float32),
        "layer2.bias": jnp.zeros((h2,), jnp.float32),
        "mu.weight": 0.1 * jax.random.normal(k3, (output_size, h2), jnp.float32),
        "mu.bias": jnp.zeros((output_size,), jnp.float32),
        "sigma": jnp.full((output_size,), INIT_LOG_STD, jnp.float32),
    }


def reference_forward(x, ctx, params):
    """Plain-JAX reference mirroring the PyTorch forward."""
    B = x.shape[0]
    out = jnp.concatenate([x, jnp.broadcast_to(ctx, (B, ctx.shape[0]))], axis=-1)
    out = jnp.maximum(out @ params["layer1.weight"].T + params["layer1.bias"], 0.0)
    out = jnp.maximum(out @ params["layer2.weight"].T + params["layer2.bias"], 0.0)
    mu = out @ params["mu.weight"].T + params["mu.bias"]
    scale = jnp.exp(jnp.maximum(params["sigma"], MIN_LOG_STD))
    return mu, scale


if __name__ == "__main__":
    # Small shapes consistent with the module (HalfCheetah-like dims).
    input_size = 16
    hidden_sizes = (32, 32)
    output_size = 6
    num_context_params = 10

    key = jax.random.PRNGKey(0)
    kp, kc, kx1, kx2, kx3 = jax.random.split(key, 5)
    params = make_params(kp, input_size, hidden_sizes, output_size,
                         num_context_params)
    # nonzero context so the folded ctx contribution is actually exercised
    context_params = 0.1 * jax.random.normal(kc, (num_context_params,),
                                             jnp.float32)

    # Packing is hoisted: done once per params, reused across forward calls.
    packed_f32 = pack_cavia_params(params, input_size, jnp.float32)
    packed_bf16 = pack_cavia_params(params, input_size, jnp.bfloat16)

    # --- small batch: gridless single-invocation path, f32 -------------------
    x_small = jax.random.normal(kx1, (8, input_size), jnp.float32)
    mu_s, scale_s = cavia_mlp_policy_forward(x_small, context_params, packed_f32)
    jax.block_until_ready((mu_s, scale_s))
    mu_ref_s, scale_ref_s = reference_forward(x_small, context_params, params)
    assert mu_s.shape == (8, output_size)
    assert scale_s.shape == (output_size,)
    assert jnp.allclose(mu_s, mu_ref_s, atol=1e-4, rtol=1e-4)
    assert jnp.allclose(scale_s, scale_ref_s, atol=1e-6, rtol=1e-6)

    # --- awkward batch: adaptive-tile "parallel" grid path, f32 --------------
    x_mid = jax.random.normal(kx2, (530, input_size), jnp.float32)
    mu_m, _ = cavia_mlp_policy_forward(x_mid, context_params, packed_f32)
    jax.block_until_ready(mu_m)
    mu_ref_m, _ = reference_forward(x_mid, context_params, params)
    assert mu_m.shape == (530, output_size)
    assert jnp.allclose(mu_m, mu_ref_m, atol=1e-4, rtol=1e-4)

    # --- large batch: grid path, bf16 operands / f32 accumulation ------------
    x_big = jax.random.normal(kx3, (1024, input_size), jnp.float32)
    mu_b, scale_b = cavia_mlp_policy_forward(x_big, context_params, packed_bf16)
    jax.block_until_ready((mu_b, scale_b))
    mu_ref_b, _ = reference_forward(x_big, context_params, params)
    assert mu_b.shape == (1024, output_size)
    assert jnp.allclose(mu_b, mu_ref_b, atol=5e-2, rtol=5e-2)

    print("KERNEL_OK")
</pallas_src>

<mosaic_0001>
module attributes {stable_mosaic.version = 11 : i64} {
  func.func @_cavia_mlp_kernel(%arg0: memref<8x16xf32, #tpu.memory_space<vmem>>, %arg1: memref<16x128xf32, #tpu.memory_space<vmem>>, %arg2: memref<128x128xf32, #tpu.memory_space<vmem>>, %arg3: memref<128x128xf32, #tpu.memory_space<vmem>>, %arg4: memref<3x128xf32, #tpu.memory_space<vmem>>, %arg5: memref<8x128xf32, #tpu.memory_space<vmem>>) attributes {dimension_semantics = [], scalar_prefetch = 0 : i64, scratch_operands = 0 : i64, tpu.core_type = #tpu.core_type<tc>} {
    %c0 = arith.constant 0 : index
    %c0_0 = arith.constant 0 : index
    %0 = vector.load %arg4[%c0, %c0_0] : memref<3x128xf32, #tpu.memory_space<vmem>>, vector<3x128xf32>
    %c0_1 = arith.constant 0 : index
    %c0_2 = arith.constant 0 : index
    %1 = vector.load %arg0[%c0_1, %c0_2] : memref<8x16xf32, #tpu.memory_space<vmem>>, vector<8x16xf32>
    %c0_3 = arith.constant 0 : index
    %c0_4 = arith.constant 0 : index
    %2 = vector.load %arg1[%c0_3, %c0_4] : memref<16x128xf32, #tpu.memory_space<vmem>>, vector<16x128xf32>
    %cst = arith.constant dense<0.000000e+00> : vector<8x128xf32>
    %3 = tpu.matmul %1, %2, %cst {dimension_numbers = #tpu.dot_dimension_numbers<[1], [0], [0], [1], [0, 0, 1, 1], [], []>} : vector<8x16xf32>, vector<16x128xf32>, vector<8x128xf32> -> vector<8x128xf32>
    %4 = vector.extract_strided_slice %0 {offsets = [0, 0], sizes = [1, 128], strides = [1, 1]} : vector<3x128xf32> to vector<1x128xf32>
    %5 = vector.broadcast %4 : vector<1x128xf32> to vector<8x128xf32>
    %6 = arith.addf %3, %5 : vector<8x128xf32>
    %cst_5 = arith.constant 0.000000e+00 : f32
    %7 = vector.broadcast %cst_5 : f32 to vector<8x128xf32>
    %8 = arith.maximumf %6, %7 : vector<8x128xf32>
    %c0_6 = arith.constant 0 : index
    %c0_7 = arith.constant 0 : index
    %9 = vector.load %arg2[%c0_6, %c0_7] : memref<128x128xf32, #tpu.memory_space<vmem>>, vector<128x128xf32>
    %cst_8 = arith.constant dense<0.000000e+00> : vector<8x128xf32>
    %10 = tpu.matmul %8, %9, %cst_8 {dimension_numbers = #tpu.dot_dimension_numbers<[1], [0], [0], [1], [0, 0, 1, 1], [], []>} : vector<8x128xf32>, vector<128x128xf32>, vector<8x128xf32> -> vector<8x128xf32>
    %11 = vector.extract_strided_slice %0 {offsets = [1, 0], sizes = [1, 128], strides = [1, 1]} : vector<3x128xf32> to vector<1x128xf32>
    %12 = vector.broadcast %11 : vector<1x128xf32> to vector<8x128xf32>
    %13 = arith.addf %10, %12 : vector<8x128xf32>
    %cst_9 = arith.constant 0.000000e+00 : f32
    %14 = vector.broadcast %cst_9 : f32 to vector<8x128xf32>
    %15 = arith.maximumf %13, %14 : vector<8x128xf32>
    %c0_10 = arith.constant 0 : index
    %c0_11 = arith.constant 0 : index
    %16 = vector.load %arg3[%c0_10, %c0_11] : memref<128x128xf32, #tpu.memory_space<vmem>>, vector<128x128xf32>
    %cst_12 = arith.constant dense<0.000000e+00> : vector<8x128xf32>
    %17 = tpu.matmul %15, %16, %cst_12 {dimension_numbers = #tpu.dot_dimension_numbers<[1], [0], [0], [1], [0, 0, 1, 1], [], []>} : vector<8x128xf32>, vector<128x128xf32>, vector<8x128xf32> -> vector<8x128xf32>
    %18 = vector.extract_strided_slice %0 {offsets = [2, 0], sizes = [1, 128], strides = [1, 1]} : vector<3x128xf32> to vector<1x128xf32>
    %19 = vector.broadcast %18 : vector<1x128xf32> to vector<8x128xf32>
    %20 = arith.addf %17, %19 : vector<8x128xf32>
    %c0_13 = arith.constant 0 : index
    %c0_14 = arith.constant 0 : index
    %21 = vector.load %arg5[%c0_13, %c0_14] : memref<8x128xf32, #tpu.memory_space<vmem>>, vector<8x128xf32>
    tpu.vector_store %arg5[%c0_13, %c0_14], %20 {strides = array<i32>} : memref<8x128xf32, #tpu.memory_space<vmem>>, vector<8x128xf32>,
    return
  }
}

</mosaic_0001>

<llo_original>
// kernel: tpu_custom_call.1
$region0: #{tpu_custom_call.1}
  #allocation0 [shape = 'u32[]', space=smem, size = 0x4, offset = 0x4, fixed_abs, tag = 'smem constant byte address 0x4 - core index']
  #allocation1 [shape = 'u32[72,128]{1,0:T(1,128)}', space=vmem, size = 0x9000, scoped, tag = 'internal scratch']
  %s0 = inlined_call_operand.hbm [shape: f32[8,16], index: 0, kind: input, shape index: {}]
  %s1 = inlined_call_operand.hbm [shape: f32[16,128], index: 1, kind: input, shape index: {}]
  %s2 = inlined_call_operand.hbm [shape: f32[128,128], index: 2, kind: input, shape index: {}]
  %s3 = inlined_call_operand.hbm [shape: f32[128,128], index: 3, kind: input, shape index: {}]
  %s4 = inlined_call_operand.hbm [shape: f32[3,128], index: 4, kind: input, shape index: {}]
  %s5 = inlined_call_operand.hbm [shape: f32[8,128], index: 5, kind: output, shape index: {}]
  %s6 = sld [smem:[#allocation0]]
  $region50: #{tpu_custom_call.1} parent=0
    _
  %s8 = ssub.s32 1, %s6
  %s9 = scalar_select 0, %s8, %s6
  $region1: #{tpu_custom_call.1} parent=0
    #allocation2 [shape = 'u8[4096]{0}', space=vmem, size = 0x1000, scoped, tag = 'input window, operand 0, single buffered']
    #allocation3 [shape = 's32[1]{0}', space=sflag, size = 0x4, scoped, tag = 'scoped memory for tpu_custom_call.1']
    #allocation4 [shape = 's32[1]{0}', space=sflag, size = 0x4, scoped, tag = 'scoped memory for tpu_custom_call.1']
    #allocation5 [shape = 'u8[8192]{0}', space=vmem, size = 0x2000, scoped, tag = 'input window, operand 1, single buffered']
    #allocation6 [shape = 's32[1]{0}', space=sflag, size = 0x4, scoped, tag = 'scoped memory for tpu_custom_call.1']
    #allocation7 [shape = 'u8[65536]{0}', space=vmem, size = 0x10000, scoped, tag = 'input window, operand 2, single buffered']
    #allocation8 [shape = 'u8[65536]{0}', space=vmem, size = 0x10000, scoped, tag = 'input window, operand 3, single buffered']
    #allocation9 [shape = 's32[1]{0}', space=sflag, size = 0x4, scoped, tag = 'scoped memory for tpu_custom_call.1']
    #allocation10 [shape = 'u8[2048]{0}', space=vmem, size = 0x800, scoped, tag = 'input window, operand 4, single buffered']
    #allocation11 [shape = 'u8[4096]{0}', space=vmem, size = 0x1000, scoped, tag = 'output window, operand 0, single buffered']
    %10 = vsyncpa [#allocation3], 0
    %11 = vsyncpa [#allocation6], 0
    %12 = vsyncpa [#allocation9], 0
    %13 = vsyncpa [#allocation4], 0
    // Predicated region
    $region2: #{tpu_custom_call.1} parent=1 // pred_check
      _
    $region3: #{tpu_custom_call.1} parent=1 // pred_check_branch
      %15 = sbr.rel (0) target = $region5
    $region4: #{tpu_custom_call.1} parent=1 // pred_region
      %17 = vsyncadd [#allocation3], 0
      %s19 = sshll.u32 %s0, 4
      %s20 = int_to_ptr.hbm [resolvable:$true] %s19
      %s21 = sshll.u32 [#allocation2], 4
      %s22 = int_to_ptr.vmem [resolvable:$true] %s21
      %24 = dma.hbm_to_vmem [thread:$0]  %s20, 128, %s22, [#allocation3]
    $region5: #{tpu_custom_call.1} parent=1 // pred_fallthru
      _
    // Predicated region
    $region6: #{tpu_custom_call.1} parent=1 // pred_check
      _
    $region7: #{tpu_custom_call.1} parent=1 // pred_check_branch
      %26 = sbr.rel (0) target = $region9
    $region8: #{tpu_custom_call.1} parent=1 // pred_region
      %28 = vsyncadd [#allocation6], 0
      %s29 = sshll.u32 %s1, 4
      %s30 = int_to_ptr.hbm [resolvable:$true] %s29
      %s31 = sshll.u32 [#allocation5], 4
      %s32 = int_to_ptr.vmem [resolvable:$true] %s31
      %37 = dma.hbm_to_vmem [thread:$0]  %s30, 256, %s32, [#allocation6], 128, 128, 8
    $region9: #{tpu_custom_call.1} parent=1 // pred_fallthru
      _
    // Predicated region
    $region10: #{tpu_custom_call.1} parent=1 // pred_check
      _
    $region11: #{tpu_custom_call.1} parent=1 // pred_check_branch
      %39 = sbr.rel (0) target = $region13
    $region12: #{tpu_custom_call.1} parent=1 // pred_region
      %41 = vsyncadd [#allocation6], 0
      %s42 = sshll.u32 %s2, 4
      %s43 = int_to_ptr.hbm [resolvable:$true] %s42
      %s44 = sshll.u32 [#allocation7], 4
      %s45 = int_to_ptr.vmem [resolvable:$true] %s44
      %50 = dma.hbm_to_vmem [thread:$0]  %s43, 2048, %s45, [#allocation6], 128, 128, 8
    $region13: #{tpu_custom_call.1} parent=1 // pred_fallthru
      _
    // Predicated region
    $region14: #{tpu_custom_call.1} parent=1 // pred_check
      _
    $region15: #{tpu_custom_call.1} parent=1 // pred_check_branch
      %52 = sbr.rel (0) target = $region17
    $region16: #{tpu_custom_call.1} parent=1 // pred_region
      %54 = vsyncadd [#allocation9], 0
      %s55 = sshll.u32 %s3, 4
      %s56 = int_to_ptr.hbm [resolvable:$true] %s55
      %s57 = sshll.u32 [#allocation8], 4
      %s58 = int_to_ptr.vmem [resolvable:$true] %s57
      %63 = dma.hbm_to_vmem [thread:$0]  %s56, 2048, %s58, [#allocation9], 128, 128, 8
    $region17: #{tpu_custom_call.1} parent=1 // pred_fallthru
      _
    // Predicated region
    $region18: #{tpu_custom_call.1} parent=1 // pred_check
      _
    $region19: #{tpu_custom_call.1} parent=1 // pred_check_branch
      %65 = sbr.rel (0) target = $region21
    $region20: #{tpu_custom_call.1} parent=1 // pred_region
      %67 = vsyncadd [#allocation9], 0
      %s69 = sshll.u32 %s4, 4
      %s70 = int_to_ptr.hbm [resolvable:$true] %s69
      %s71 = sshll.u32 [#allocation10], 4
      %s72 = int_to_ptr.vmem [resolvable:$true] %s71
      %74 = dma.hbm_to_vmem [thread:$0]  %s70, 64, %s72, [#allocation9]
    $region21: #{tpu_custom_call.1} parent=1 // pred_fallthru
      _
    // Predicated region
    $region22: #{tpu_custom_call.1} parent=1 // pred_check
      _
    $region23: #{tpu_custom_call.1} parent=1 // pred_check_branch
      %76 = sbr.rel (0) target = $region25
    $region24: #{tpu_custom_call.1} parent=1 // pred_region
      %78 = dma.done [#allocation3], 128
    $region25: #{tpu_custom_call.1} parent=1 // pred_fallthru
      _
    // Predicated region
    $region26: #{tpu_custom_call.1} parent=1 // pred_check
      _
    $region27: #{tpu_custom_call.1} parent=1 // pred_check_branch
      %80 = sbr.rel (0) target = $region29
    $region28: #{tpu_custom_call.1} parent=1 // pred_region
      %82 = dma.done [#allocation6], 256
    $region29: #{tpu_custom_call.1} parent=1 // pred_fallthru
      _
    // Predicated region
    $region30: #{tpu_custom_call.1} parent=1 // pred_check
      _
    $region31: #{tpu_custom_call.1} parent=1 // pred_check_branch
      %84 = sbr.rel (0) target = $region33
    $region32: #{tpu_custom_call.1} parent=1 // pred_region
      %86 = dma.done [#allocation6], 2048
    $region33: #{tpu_custom_call.1} parent=1 // pred_fallthru
      _
    // Predicated region
    $region34: #{tpu_custom_call.1} parent=1 // pred_check
      _
    $region35: #{tpu_custom_call.1} parent=1 // pred_check_branch
      %88 = sbr.rel (0) target = $region37
    $region36: #{tpu_custom_call.1} parent=1 // pred_region
      %90 = dma.done [#allocation9], 2048
    $region37: #{tpu_custom_call.1} parent=1 // pred_fallthru
      _
    // Predicated region
    $region38: #{tpu_custom_call.1} parent=1 // pred_check
      _
    $region39: #{tpu_custom_call.1} parent=1 // pred_check_branch
      %92 = sbr.rel (0) target = $region41
    $region40: #{tpu_custom_call.1} parent=1 // pred_region
      %94 = dma.done [#allocation9], 64
    $region41: #{tpu_custom_call.1} parent=1 // pred_fallthru
      _
    %v95 = vld [vmem:[#allocation10] sm:$0x7]
    %v96 = vld [vmem:[#allocation2] sm:$0xff]
    %v97 = vld [vmem:[#allocation5] sm:$0xff]
    %v98 = vld [vmem:[#allocation5 + $0x8] sm:$0xff]
    %v99 = vperm.slane %v95, 0
    %vm100 = vcmask 130048
    %v102 = vsel %vm100, %v96, 0
    %104 = vmatpush.msra.mxu0 0.0
    %105 = vmatpush.msra.mxu0 0.0
    %106 = vmatpush.msra.mxu0 0.0
    %107 = vmatpush.msra.mxu0 0.0
    %108 = vmatpush.msra.mxu0 0.0
    %109 = vmatpush.msra.mxu0 0.0
    %110 = vmatpush.msra.mxu0 0.0
    %111 = vmatpush.msra.mxu0 0.0
    %112 = vmatpush.msra.mxu0 0.0
    %113 = vmatpush.msra.mxu0 0.0
    %114 = vmatpush.msra.mxu0 0.0
    %115 = vmatpush.msra.mxu0 0.0
    %116 = vmatpush.msra.mxu0 0.0
    %117 = vmatpush.msra.mxu0 0.0
    %118 = vmatpush.msra.mxu0 %v98
    %119 = vmatpush.msra.mxu0 %v97
    %120 = vmatmul.f32.gmra.mxu0 %v102
    %v121 = vpop.f32.mrf.mxu0
    %v122 = vadd.f32 %v99, %v121
    %123 = vdwg.mxu0
    %v124 = vmax.f32 %v122, 0.0
    %v125 = vld [vmem:[#allocation7] sm:$0xff]
    %v126 = vld [vmem:[#allocation7 + $0x8] sm:$0xff]
    %v127 = vld [vmem:[#allocation7 + $0x10] sm:$0xff]
    %v128 = vld [vmem:[#allocation7 + $0x18] sm:$0xff]
    %v129 = vld [vmem:[#allocation7 + $0x20] sm:$0xff]
    %v130 = vld [vmem:[#allocation7 + $0x28] sm:$0xff]
    %v131 = vld [vmem:[#allocation7 + $0x30] sm:$0xff]
    %v132 = vld [vmem:[#allocation7 + $0x38] sm:$0xff]
    %v133 = vld [vmem:[#allocation7 + $0x40] sm:$0xff]
    %v134 = vld [vmem:[#allocation7 + $0x48] sm:$0xff]
    %v135 = vld [vmem:[#allocation7 + $0x50] sm:$0xff]
    %v136 = vld [vmem:[#allocation7 + $0x58] sm:$0xff]
    %v137 = vld [vmem:[#allocation7 + $0x60] sm:$0xff]
    %v138 = vld [vmem:[#allocation7 + $0x68] sm:$0xff]
    %v139 = vld [vmem:[#allocation7 + $0x70] sm:$0xff]
    %v140 = vld [vmem:[#allocation7 + $0x78] sm:$0xff]
    %v141 = vperm.slane %v95, 1
    %142 = vmatpush.msra.mxu0 %v140
    %143 = vmatpush.msra.mxu0 %v139
    %144 = vmatpush.msra.mxu0 %v138
    %145 = vmatpush.msra.mxu0 %v137
    %146 = vmatpush.msra.mxu0 %v136
    %147 = vmatpush.msra.mxu0 %v135
    %148 = vmatpush.msra.mxu0 %v134
    %149 = vmatpush.msra.mxu0 %v133
    %150 = vmatpush.msra.mxu0 %v132
    %151 = vmatpush.msra.mxu0 %v131
    %152 = vmatpush.msra.mxu0 %v130
    %153 = vmatpush.msra.mxu0 %v129
    %154 = vmatpush.msra.mxu0 %v128
    %155 = vmatpush.msra.mxu0 %v127
    %156 = vmatpush.msra.mxu0 %v126
    %157 = vmatpush.msra.mxu0 %v125
    %158 = vmatmul.f32.gmra.mxu0 %v124
    %v159 = vpop.f32.mrf.mxu0
    %v160 = vadd.f32 %v141, %v159
    %161 = vdwg.mxu0
    %v162 = vmax.f32 %v160, 0.0
    %v163 = vld [vmem:[#allocation8] sm:$0xff]
    %v164 = vld [vmem:[#allocation8 + $0x8] sm:$0xff]
    %v165 = vld [vmem:[#allocation8 + $0x10] sm:$0xff]
    %v166 = vld [vmem:[#allocation8 + $0x18] sm:$0xff]
    %v167 = vld [vmem:[#allocation8 + $0x20] sm:$0xff]
    %v168 = vld [vmem:[#allocation8 + $0x28] sm:$0xff]
    %v169 = vld [vmem:[#allocation8 + $0x30] sm:$0xff]
    %v170 = vld [vmem:[#allocation8 + $0x38] sm:$0xff]
    %v171 = vld [vmem:[#allocation8 + $0x40] sm:$0xff]
    %v172 = vld [vmem:[#allocation8 + $0x48] sm:$0xff]
    %v173 = vld [vmem:[#allocation8 + $0x50] sm:$0xff]
    %v174 = vld [vmem:[#allocation8 + $0x58] sm:$0xff]
    %v175 = vld [vmem:[#allocation8 + $0x60] sm:$0xff]
    %v176 = vld [vmem:[#allocation8 + $0x68] sm:$0xff]
    %v177 = vld [vmem:[#allocation8 + $0x70] sm:$0xff]
    %v178 = vld [vmem:[#allocation8 + $0x78] sm:$0xff]
    %v179 = vperm.slane %v95, 2
    %180 = vmatpush.msra.mxu0 %v178
    %181 = vmatpush.msra.mxu0 %v177
    %182 = vmatpush.msra.mxu0 %v176
    %183 = vmatpush.msra.mxu0 %v175
    %184 = vmatpush.msra.mxu0 %v174
    %185 = vmatpush.msra.mxu0 %v173
    %186 = vmatpush.msra.mxu0 %v172
    %187 = vmatpush.msra.mxu0 %v171
    %188 = vmatpush.msra.mxu0 %v170
    %189 = vmatpush.msra.mxu0 %v169
    %190 = vmatpush.msra.mxu0 %v168
    %191 = vmatpush.msra.mxu0 %v167
    %192 = vmatpush.msra.mxu0 %v166
    %193 = vmatpush.msra.mxu0 %v165
    %194 = vmatpush.msra.mxu0 %v164
    %195 = vmatpush.msra.mxu0 %v163
    %196 = vmatmul.f32.gmra.mxu0 %v162
    %v197 = vpop.f32.mrf.mxu0
    %v198 = vadd.f32 %v179, %v197
    %199 = vdwg.mxu0
    %200 = vst [vmem:[#allocation11] sm:$0xff] %v198
    // Predicated region
    $region42: #{tpu_custom_call.1} parent=1 // pred_check
      _
    $region43: #{tpu_custom_call.1} parent=1 // pred_check_branch
      %202 = sbr.rel (0) target = $region45
    $region44: #{tpu_custom_call.1} parent=1 // pred_region
      %204 = vsyncadd [#allocation4], 0
      %s206 = sshll.u32 [#allocation11], 4
      %s207 = int_to_ptr.vmem [resolvable:$true] %s206
      %s208 = sshll.u32 %s5, 4
      %s209 = int_to_ptr.hbm [resolvable:$true] %s208
      %211 = dma.vmem_to_hbm [thread:$0]  %s207, 128, %s209, [#allocation4]
    $region45: #{tpu_custom_call.1} parent=1 // pred_fallthru
      _
    // Predicated region
    $region46: #{tpu_custom_call.1} parent=1 // pred_check
      _
    $region47: #{tpu_custom_call.1} parent=1 // pred_check_branch
      %213 = sbr.rel (0) target = $region49
    $region48: #{tpu_custom_call.1} parent=1 // pred_region
      %215 = dma.done [#allocation4], 128
    $region49: #{tpu_custom_call.1} parent=1 // pred_fallthru
      _
    %216 = vsyncpa [#allocation3], 1
    %217 = vsyncpa [#allocation6], 1
    %218 = vsyncpa [#allocation9], 1
    %219 = vsyncpa [#allocation4], 1

</llo_original>
